<compile_context>
chip_gen: v6e
topology: v6e:2x2x1
jax: 0.10.0
libtpu: 0.0.40
codegen_flags: <defaults>
</compile_context>

<pallas_src>
from functools import partial

import jax
import jax.numpy as jnp
from jax.experimental import pallas as pl
from jax.experimental.pallas import tpu as pltpu

ALPHA = 0.25
GAMMA = 2.0          # gamma == 2 -> explicit squaring inside the kernel
WEIGHTS = (1.0, 1.0)


# ----------------------------------------------------------------------------
# Stage 1: streaming max over the frame/time axis (HBM-bandwidth bound).
# ----------------------------------------------------------------------------
def _frame_max_kernel(frame_ref, out_ref, maxacc_ref, *,
                      n_t, t_tile, t_true, neg_fill):
    s = pl.program_id(1)
    t = pl.program_id(2)

    tile = frame_ref[...]                       # (B_TILE, T_TILE, C), input dtype
    if t_true is not None:
        # Tail tile overruns the true frame count: mask padded rows with the
        # dtype's FINITE min (not -inf; bf16-safe) before reducing.
        t0 = (s * n_t + t) * t_tile
        row = jax.lax.broadcasted_iota(jnp.int32, tile.shape, 1)
        tile = jnp.where(row + t0 < t_true, tile,
                         jnp.asarray(neg_fill, dtype=tile.dtype))

    # Max over the time rows in the input dtype; only the small (B_TILE, C)
    # result is carried in f32.
    tile_max = jnp.max(tile, axis=1).astype(jnp.float32)

    @pl.when(t == 0)
    def _():
        maxacc_ref[...] = tile_max

    @pl.when(t != 0)
    def _():
        maxacc_ref[...] = jnp.maximum(maxacc_ref[...], tile_max)

    @pl.when(t == n_t - 1)
    def _():
        out_ref[...] = maxacc_ref[...][None]    # (1, B_TILE, C) partial max


# ----------------------------------------------------------------------------
# Stage 2: fused 2-way focal loss on (B, C) -- tiny relative to the stream.
# ----------------------------------------------------------------------------
def _focal_2way_kernel(logit_ref, pmax_ref, target_ref, out_ref, *, w0, w1):
    tgt = target_ref[...].astype(jnp.float32)
    alpha_t = tgt * ALPHA            # shared subexpressions, hoisted
    one_m_t = 1.0 - tgt

    def focal(p):
        # Reuse e = exp(-|p|) for both the stable BCE and the sigmoid.
        e = jnp.exp(-jnp.abs(p))
        bce = jnp.maximum(p, 0.0) - p * tgt + jnp.log1p(e)
        inv = 1.0 / (1.0 + e)                       # exact (keeps 1e-5 match)
        pr = jnp.where(p >= 0.0, inv, e * inv)      # sigmoid(p)
        one_m_pr = 1.0 - pr
        # gamma == 2.0 -> plain squares (stays on the VPU, no generic pow)
        return (alpha_t * (one_m_pr * one_m_pr) + one_m_t * (pr * pr)) * bce

    cmax = jnp.max(pmax_ref[...].astype(jnp.float32), axis=0)  # combine T splits
    combined = (w0 * focal(logit_ref[...].astype(jnp.float32))
                + w1 * focal(cmax))

    # One cross-lane reduction; broadcast into a lane-dense (8, 128) block.
    out_ref[...] = jnp.full(out_ref.shape, jnp.sum(combined), dtype=jnp.float32)


# ----------------------------------------------------------------------------
# Wrapper
# ----------------------------------------------------------------------------
def _vmem_capacity_bytes():
    try:
        return int(pltpu.get_tpu_info().vmem_capacity_bytes)
    except Exception:
        pass
    try:
        if "v7" in jax.devices()[0].device_kind.lower():
            return 64 * 1024 * 1024
    except Exception:
        pass
    return 128 * 1024 * 1024          # v5e / v6e default


def _choose_t_tile(T, bytes_per_t_row, budget_bytes):
    """Largest multiple-of-8 row count whose frame tile fits the budget.
    No divisor constraint on T: the grid uses cdiv and the tail tile is
    masked in-kernel."""
    rows = max(8, int(budget_bytes // max(1, bytes_per_t_row)))
    t_tile = (rows // 8) * 8
    if t_tile >= T:
        return T                       # whole axis in one (full-dim) block
    return t_tile


def bce_focal_2way_loss(logit, framewise_logit, target, weights=WEIGHTS):
    B, C = logit.shape
    Bf, T, Cf = framewise_logit.shape
    assert (B, C) == (Bf, Cf) and target.shape == (B, C)
    w0, w1 = float(weights[0]), float(weights[1])
    itemsize = jnp.dtype(framewise_logit.dtype).itemsize

    # ---- generation-aware VMEM budget (v7x: 64 MiB, v5e/v6e: 128 MiB) -----
    vmem_cap = _vmem_capacity_bytes()
    if vmem_cap <= 64 * 1024 * 1024:          # v7x-like: smaller VMEM, 2 TCs
        tile_budget = 10 * 1024 * 1024
        vmem_limit = 48 * 1024 * 1024
        two_cores = True
    else:                                     # v5e / v6e: big VMEM, 1 TC
        tile_budget = 20 * 1024 * 1024
        vmem_limit = 96 * 1024 * 1024
        two_cores = False

    # ---- batch tiling: "parallel" axis -------------------------------------
    B_TILE = 8 if (B % 8 == 0) else B
    n_b = B // B_TILE

    # ---- T tiling: streamed "arbitrary" reduction axis ---------------------
    T_TILE = _choose_t_tile(T, B_TILE * C * itemsize, tile_budget)
    total_t_blocks = pl.cdiv(T, T_TILE)

    # Optional 2-way "parallel" split of the T reduction so that a single
    # batch block can still use both v7x TensorCores.
    n_s = 2 if (two_cores and n_b == 1 and total_t_blocks >= 2
                and total_t_blocks % 2 == 0) else 1
    n_t = total_t_blocks // n_s

    needs_mask = (n_s * n_t * T_TILE != T)
    neg_fill = float(jnp.finfo(framewise_logit.dtype).min) if needs_mask else 0.0

    kernel1 = partial(_frame_max_kernel, n_t=n_t, t_tile=T_TILE,
                      t_true=(T if needs_mask else None), neg_fill=neg_fill)

    ce1 = pl.CostEstimate(
        flops=int(B * T * C),
        transcendentals=0,
        bytes_accessed=int(B * T * C * itemsize + n_s * B * C * 4))

    partial_max = pl.pallas_call(
        kernel1,
        out_shape=jax.ShapeDtypeStruct((n_s, B, C), jnp.float32),
        grid=(n_b, n_s, n_t),
        in_specs=[
            # Unpadded: full true C as the last block dim (full-dim blocks are
            # exempt from the 128 rule) -> no extra HBM pass in the wrapper.
            pl.BlockSpec((B_TILE, T_TILE, C),
                         lambda b, s, t: (b, s * n_t + t, 0)),
        ],
        out_specs=pl.BlockSpec((1, B_TILE, C), lambda b, s, t: (s, b, 0)),
        scratch_shapes=[pltpu.VMEM((B_TILE, C), jnp.float32)],   # running max
        compiler_params=pltpu.CompilerParams(
            dimension_semantics=("parallel", "parallel", "arbitrary"),
            vmem_limit_bytes=vmem_limit),
        cost_estimate=ce1,
    )(framewise_logit)

    # ---- tiny fused focal epilogue on (B, C) -------------------------------
    ce2 = pl.CostEstimate(
        flops=int(40 * B * C),
        transcendentals=int(4 * B * C),
        bytes_accessed=int((2 + n_s) * B * C * 4 + 8 * 128 * 4))

    out = pl.pallas_call(
        partial(_focal_2way_kernel, w0=w0, w1=w1),
        out_shape=jax.ShapeDtypeStruct((8, 128), jnp.float32),
        cost_estimate=ce2,
    )(logit, partial_max, target)

    return out[0, 0] / float(B * C)           # divide by the TRUE count


def _reference(logit, framewise_logit, target):
    """Pure-JAX reference mirroring the PyTorch module."""
    def focal(p, t):
        bce = jnp.maximum(p, 0.0) - p * t + jnp.log1p(jnp.exp(-jnp.abs(p)))
        pr = jax.nn.sigmoid(p)
        l = (t * ALPHA * (1.0 - pr) ** GAMMA * bce
             + (1.0 - t) * pr ** GAMMA * bce)
        return jnp.mean(l)

    cmax = jnp.max(framewise_logit, axis=1)
    return WEIGHTS[0] * focal(logit, target) + WEIGHTS[1] * focal(cmax, target)


if __name__ == "__main__":
    B, T, C = 2, 8, 32
    key = jax.random.PRNGKey(0)
    k1, k2, k3 = jax.random.split(key, 3)

    logit = jax.random.normal(k1, (B, C), dtype=jnp.float32)
    framewise_logit = jax.random.normal(k2, (B, T, C), dtype=jnp.float32)
    # binary-ish float targets, as target.float() would produce
    target = (jax.random.uniform(k3, (B, C)) > 0.5).astype(jnp.float32)

    loss = bce_focal_2way_loss(logit, framewise_logit, target)
    loss = jax.block_until_ready(loss)

    ref = _reference(logit, framewise_logit, target)
    assert jnp.allclose(loss, ref, rtol=1e-5, atol=1e-5), (loss, ref)

    print("KERNEL_OK")
</pallas_src>

<mosaic_0001>
module attributes {stable_mosaic.version = 11 : i64} {
  func.func @_frame_max_kernel(%arg0: i32, %arg1: i32, %arg2: i32, %arg3: memref<2x8x32xf32, #tpu.memory_space<vmem>>, %arg4: memref<1x2x32xf32, #tpu.memory_space<vmem>>, %arg5: memref<2x32xf32, #tpu.memory_space<vmem>>) attributes {dimension_semantics = [#tpu.dimension_semantics<parallel>, #tpu.dimension_semantics<parallel>, #tpu.dimension_semantics<arbitrary>], iteration_bounds = array<i64: 1, 1, 1>, scalar_prefetch = 0 : i64, scratch_operands = 1 : i64, tpu.core_type = #tpu.core_type<tc>, window_params = [{transform_indices = @transform_0, window_bounds = array<i64: 2, 8, 32>}, {transform_indices = @transform_1, window_bounds = array<i64: 1, 2, 32>}]} {
    %c0 = arith.constant 0 : index
    %c0_0 = arith.constant 0 : index
    %c0_1 = arith.constant 0 : index
    %0 = vector.load %arg3[%c0, %c0_0, %c0_1] : memref<2x8x32xf32, #tpu.memory_space<vmem>>, vector<2x8x32xf32>
    %cst = arith.constant dense<0xFF800000> : vector<2x32xf32>
    %1 = vector.multi_reduction <maximumf>, %0, %cst [1] : vector<2x8x32xf32> to vector<2x32xf32>
    %c0_i32 = arith.constant 0 : i32
    %2 = arith.cmpi eq, %arg2, %c0_i32 : i32
    %3 = arith.extui %2 : i1 to i32
    %c0_i32_2 = arith.constant 0 : i32
    %4 = arith.cmpi ne, %3, %c0_i32_2 : i32
    scf.if %4 {
      %c0_7 = arith.constant 0 : index
      %c0_8 = arith.constant 0 : index
      %11 = vector.load %arg5[%c0_7, %c0_8] : memref<2x32xf32, #tpu.memory_space<vmem>>, vector<2x32xf32>
      tpu.vector_store %arg5[%c0_7, %c0_8], %1 {strides = array<i32>} : memref<2x32xf32, #tpu.memory_space<vmem>>, vector<2x32xf32>,
    } else {
    }
    %c0_i32_3 = arith.constant 0 : i32
    %5 = arith.cmpi ne, %arg2, %c0_i32_3 : i32
    %6 = arith.extui %5 : i1 to i32
    %c0_i32_4 = arith.constant 0 : i32
    %7 = arith.cmpi ne, %6, %c0_i32_4 : i32
    scf.if %7 {
      %c0_7 = arith.constant 0 : index
      %c0_8 = arith.constant 0 : index
      %11 = vector.load %arg5[%c0_7, %c0_8] : memref<2x32xf32, #tpu.memory_space<vmem>>, vector<2x32xf32>
      %12 = arith.maximumf %11, %1 : vector<2x32xf32>
      %c0_9 = arith.constant 0 : index
      %c0_10 = arith.constant 0 : index
      %13 = vector.load %arg5[%c0_9, %c0_10] : memref<2x32xf32, #tpu.memory_space<vmem>>, vector<2x32xf32>
      tpu.vector_store %arg5[%c0_9, %c0_10], %12 {strides = array<i32>} : memref<2x32xf32, #tpu.memory_space<vmem>>, vector<2x32xf32>,
    } else {
    }
    %c0_i32_5 = arith.constant 0 : i32
    %8 = arith.cmpi eq, %arg2, %c0_i32_5 : i32
    %9 = arith.extui %8 : i1 to i32
    %c0_i32_6 = arith.constant 0 : i32
    %10 = arith.cmpi ne, %9, %c0_i32_6 : i32
    scf.if %10 {
      %c0_7 = arith.constant 0 : index
      %c0_8 = arith.constant 0 : index
      %11 = vector.load %arg5[%c0_7, %c0_8] : memref<2x32xf32, #tpu.memory_space<vmem>>, vector<2x32xf32>
      %12 = vector.shape_cast %11 : vector<2x32xf32> to vector<1x2x32xf32>
      %c0_9 = arith.constant 0 : index
      %c0_10 = arith.constant 0 : index
      %c0_11 = arith.constant 0 : index
      %13 = vector.load %arg4[%c0_9, %c0_10, %c0_11] : memref<1x2x32xf32, #tpu.memory_space<vmem>>, vector<1x2x32xf32>
      tpu.vector_store %arg4[%c0_9, %c0_10, %c0_11], %12 {strides = array<i32>} : memref<1x2x32xf32, #tpu.memory_space<vmem>>, vector<1x2x32xf32>,
    } else {
    }
    return
  }
  func.func @transform_0(%arg0: i32, %arg1: i32, %arg2: i32) -> (i32, i32, i32) {
    %c1_i32 = arith.constant 1 : i32
    %0 = arith.muli %arg1, %c1_i32 : i32
    %1 = arith.addi %0, %arg2 : i32
    %c0_i32 = arith.constant 0 : i32
    %c0_i32_0 = arith.constant 0 : i32
    return %arg0, %1, %c0_i32 : i32, i32, i32
  }
  func.func @transform_1(%arg0: i32, %arg1: i32, %arg2: i32) -> (i32, i32, i32) {
    %c0_i32 = arith.constant 0 : i32
    %c0_i32_0 = arith.constant 0 : i32
    return %arg1, %arg0, %c0_i32 : i32, i32, i32
  }
}

</mosaic_0001>

<llo_original>
// kernel: tpu_custom_call.1
$region0: #{tpu_custom_call.1}
  #allocation0 [shape = 'u32[]', space=smem, size = 0x4, offset = 0x4, fixed_abs, tag = 'smem constant byte address 0x4 - core index']
  #allocation1 [shape = 'u32[144,128]{1,0:T(1,128)}', space=vmem, size = 0x12000, scoped, tag = 'internal scratch']
  #allocation2 [shape = 'f32[2,32]{1,0:T(2,128)}', space=vmem, size = 0x400, scoped, tag = 'scratch operand']
  %s0 = inlined_call_operand.hbm [shape: f32[2,8,32], index: 0, kind: input, shape index: {}]
  %s1 = inlined_call_operand.hbm [shape: f32[1,2,32], index: 1, kind: output, shape index: {}]
  %s2 = sld [smem:[#allocation0]]
  $region30: #{tpu_custom_call.1} parent=0
    _
  %s4 = ssub.s32 1, %s2
  %s5 = scalar_select 0, %s4, %s2
  $region1: #{tpu_custom_call.1} parent=0
    #allocation3 [shape = 'u8[8192]{0}', space=vmem, size = 0x2000, scoped, tag = 'input window, operand 0, single buffered']
    #allocation4 [shape = 's32[1]{0}', space=sflag, size = 0x4, scoped, tag = 'scoped memory for tpu_custom_call.1']
    #allocation5 [shape = 's32[1]{0}', space=sflag, size = 0x4, scoped, tag = 'scoped memory for tpu_custom_call.1']
    #allocation6 [shape = 'u8[1024]{0}', space=vmem, size = 0x400, scoped, tag = 'output window, operand 0, single buffered']
    %6 = vsyncpa [#allocation4], 0
    %7 = vsyncpa [#allocation5], 0
    // Predicated region
    $region2: #{tpu_custom_call.1} parent=1 // pred_check
      _
    $region3: #{tpu_custom_call.1} parent=1 // pred_check_branch
      %9 = sbr.rel (0) target = $region5
    $region4: #{tpu_custom_call.1} parent=1 // pred_region
      %s10 = sadd.s32 0, 0
      %s12 = ssub.s32 256, 256
      %13 = vsyncadd [#allocation4], %s12
      %s14 = smul.addr %s10, 128
      %s15 = scalar_lea.hbm %s0, %s14
      %s16 = sshll.u32 [#allocation3], 4
      %s17 = int_to_ptr.vmem [resolvable:$true] %s16
      %22 = dma.hbm_to_vmem [thread:$0]  %s15, 256, %s17, [#allocation4], 128, 128, 8
    $region5: #{tpu_custom_call.1} parent=1 // pred_fallthru
      _
    // Predicated region
    $region6: #{tpu_custom_call.1} parent=1 // pred_check
      _
    $region7: #{tpu_custom_call.1} parent=1 // pred_check_branch
      %24 = sbr.rel (0) target = $region9
    $region8: #{tpu_custom_call.1} parent=1 // pred_region
      %25 = dma.done [#allocation4], 256
    $region9: #{tpu_custom_call.1} parent=1 // pred_fallthru
      _
    %s26 = sadd.s32 0, 0
    %v27 = vld [vmem:[#allocation3] sm:$0xff]
    %v28 = vld [vmem:[#allocation3 + $0x8] sm:$0xff]
    %vm29 = vcmask 261120
    %v30 = vsel %vm29, %v27, -inf
    %v31 = vrot.slane %v30, 4
    %v32 = vmax.f32 %v30, %v31
    %v33 = vrot.slane %v32, 2
    %v34 = vmax.f32 %v32, %v33
    %v35 = vrot.slane %v34, 1
    %v36 = vmax.f32 %v34, %v35
    %v37 = vsel %vm29, %v28, -inf
    %v38 = vrot.slane %v37, 4
    %v39 = vmax.f32 %v37, %v38
    %v40 = vrot.slane %v39, 2
    %v41 = vmax.f32 %v39, %v40
    %v42 = vrot.slane %v41, 1
    %v43 = vmax.f32 %v41, %v42
    %p44 = scmp.eq.s32.totalorder 0, 0
    // Predicated region
    $region10: #{tpu_custom_call.1} parent=1 // pred_check
      %p45 = pneg %p44
    $region11: #{tpu_custom_call.1} parent=1 // pred_check_branch
      %47 = sbr.rel (%p45) target = $region13
    $region12: #{tpu_custom_call.1} parent=1 // pred_region
      %vm50 = vcmask 1041409
      %v51 = vsel %vm50, %v43, %v36
      %vm53 = vcmask 254976
      %54 = vst.msk [vmem:[#allocation2] sm:$0x3] %vm53, %v51
    $region13: #{tpu_custom_call.1} parent=1 // pred_fallthru
      _
    %p55 = scmp.ne.s32.totalorder 0, 0
    // Predicated region
    $region14: #{tpu_custom_call.1} parent=1 // pred_check
      %p56 = pneg %p55
    $region15: #{tpu_custom_call.1} parent=1 // pred_check_branch
      %58 = sbr.rel (%p56) target = $region17
    $region16: #{tpu_custom_call.1} parent=1 // pred_region
      %v59 = vld [vmem:[#allocation2] sm:$0x3]
      %vm62 = vcmask 1041409
      %v63 = vsel %vm62, %v43, %v36
      %v65 = vmax.f32 %v59, %v63
      %vm66 = vcmask 254976
      %67 = vst.msk [vmem:[#allocation2] sm:$0x3] %vm66, %v65
    $region17: #{tpu_custom_call.1} parent=1 // pred_fallthru
      _
    // Predicated region
    $region18: #{tpu_custom_call.1} parent=1 // pred_check
      %p68 = pneg %p44
    $region19: #{tpu_custom_call.1} parent=1 // pred_check_branch
      %70 = sbr.rel (%p68) target = $region21
    $region20: #{tpu_custom_call.1} parent=1 // pred_region
      %v71 = vld [vmem:[#allocation2] sm:$0x3]
      %vm72 = vcmask 254976
      %73 = vst.msk [vmem:[#allocation6] sm:$0x3] %vm72, %v71
    $region21: #{tpu_custom_call.1} parent=1 // pred_fallthru
      _
    // Predicated region
    $region22: #{tpu_custom_call.1} parent=1 // pred_check
      _
    $region23: #{tpu_custom_call.1} parent=1 // pred_check_branch
      %75 = sbr.rel (0) target = $region25
    $region24: #{tpu_custom_call.1} parent=1 // pred_region
      %s77 = ssub.s32 32, 32
      %78 = vsyncadd [#allocation5], %s77
      %s80 = sshll.u32 [#allocation6], 4
      %s81 = int_to_ptr.vmem [resolvable:$true] %s80
      %83 = dma.vmem_to_hbm [thread:$0]  %s81, 32, %s1, [#allocation5]
    $region25: #{tpu_custom_call.1} parent=1 // pred_fallthru
      _
    // Predicated region
    $region26: #{tpu_custom_call.1} parent=1 // pred_check
      _
    $region27: #{tpu_custom_call.1} parent=1 // pred_check_branch
      %85 = sbr.rel (0) target = $region29
    $region28: #{tpu_custom_call.1} parent=1 // pred_region
      %86 = dma.done [#allocation5], 32
    $region29: #{tpu_custom_call.1} parent=1 // pred_fallthru
      _
    %87 = vsyncpa [#allocation4], 1
    %88 = vsyncpa [#allocation5], 1

</llo_original>
